<compile_context>
chip_gen: v6e
topology: v6e:2x2x1
jax: 0.10.0
libtpu: 0.0.40
codegen_flags: <defaults>
</compile_context>

<pallas_src>
import functools

import jax
import jax.numpy as jnp
from jax.experimental import pallas as pl
from jax.experimental.pallas import tpu as pltpu


# ----------------------------------------------------------------------------
# hardware-aware defaults
# ----------------------------------------------------------------------------

@functools.lru_cache(maxsize=None)
def _tpu_vmem_capacity():
    try:
        return int(pltpu.get_tpu_info().vmem_capacity_bytes)
    except Exception:
        return 64 * 1024 * 1024          # conservative (v7x-sized) fallback


@functools.lru_cache(maxsize=None)
def _vmem_limit_bytes():
    cap = _tpu_vmem_capacity()
    # leave ~25% headroom under physical, never ask for more than 96 MiB
    return int(min(cap - cap // 4, 96 * 1024 * 1024))


@functools.lru_cache(maxsize=None)
def _default_tiles():
    if _tpu_vmem_capacity() >= 100 * 1024 * 1024:   # v5e / v6e: 128 MiB VMEM
        return 768, 1024, 512
    return 512, 1024, 512                           # v7x: 64 MiB per TC


# ----------------------------------------------------------------------------
# small helpers
# ----------------------------------------------------------------------------

def _round_up(x, m):
    return (x + m - 1) // m * m


def _pad2(a, rows, cols):
    pr, pc = rows - a.shape[0], cols - a.shape[1]
    if pr == 0 and pc == 0:
        return a
    return jnp.pad(a, ((0, pr), (0, pc)))


def _tile(dim, target, mult):
    """Largest divisor of `dim` that is a multiple of `mult` and <= target.
    Falls back to the full dim (a full-extent block is always legal)."""
    if dim % mult != 0 or dim <= target:
        return dim
    t = (min(target, dim) // mult) * mult
    while t >= mult:
        if dim % t == 0:
            return t
        t -= mult
    return dim


def _erf(x):
    # Abramowitz & Stegun 7.1.26 rational approximation, |err| < 1.5e-7.
    a1, a2, a3, a4, a5 = 0.254829592, -0.284496736, 1.421413741, -1.453152027, 1.061405429
    p = 0.3275911
    sgn = jnp.where(x >= 0.0, 1.0, -1.0)
    ax = jnp.abs(x)
    t = 1.0 / (1.0 + p * ax)
    poly = ((((a5 * t + a4) * t + a3) * t + a2) * t + a1) * t
    return sgn * (1.0 - poly * jnp.exp(-ax * ax))


def _gelu_exact(x):
    # torch nn.GELU default (erf form).
    return 0.5 * x * (1.0 + _erf(x * 0.7071067811865476))


# ----------------------------------------------------------------------------
# Fused tiled matmul kernel:  o = epilogue( prologue(x) @ w + b )
#   prologue : optional per-channel affine on x (ResMLP Affine before MLP)
#   epilogue : optional activation (gelu/tanh), layer-scale, residual add,
#              LayerNorm (requires full-N tile)
# ----------------------------------------------------------------------------

def _fused_linear_kernel(*refs, activation, has_in_affine, has_residual,
                         has_out_scale, has_ln, ln_eps):
    it = iter(refs)
    x_ref = next(it)
    w_ref = next(it)
    b_ref = next(it)
    ia_ref = next(it) if has_in_affine else None
    ib_ref = next(it) if has_in_affine else None
    r_ref = next(it) if has_residual else None
    s_ref = next(it) if has_out_scale else None
    g_ref = next(it) if has_ln else None
    gb_ref = next(it) if has_ln else None
    o_ref = next(it)
    acc_ref = next(it)

    k = pl.program_id(2)

    @pl.when(k == 0)
    def _init():
        acc_ref[...] = jnp.zeros_like(acc_ref)

    if has_in_affine:
        xb = x_ref[...].astype(jnp.float32)
        xb = xb * ia_ref[...].astype(jnp.float32) + ib_ref[...].astype(jnp.float32)
        xb = xb.astype(jnp.bfloat16)
    else:
        # no f32 round trip — feed the MXU directly.
        xb = x_ref[...].astype(jnp.bfloat16)
    acc_ref[...] += jnp.dot(xb, w_ref[...].astype(jnp.bfloat16),
                            preferred_element_type=jnp.float32)

    @pl.when(k == pl.num_programs(2) - 1)
    def _finalize():
        y = acc_ref[...] + b_ref[...].astype(jnp.float32)
        if activation == "gelu":
            y = _gelu_exact(y)
        elif activation == "tanh":
            y = jnp.tanh(y)
        if has_out_scale:
            y = y * s_ref[...].astype(jnp.float32)
        if has_residual:
            y = y + r_ref[...].astype(jnp.float32)
        if has_ln:
            mu = jnp.mean(y, axis=-1, keepdims=True)
            yc = y - mu
            var = jnp.mean(yc * yc, axis=-1, keepdims=True)
            y = yc * jax.lax.rsqrt(var + ln_eps)
            y = y * g_ref[...].astype(jnp.float32) + gb_ref[...].astype(jnp.float32)
        o_ref[...] = y.astype(o_ref.dtype)


def fused_linear(x, w, b, *, activation=None, in_affine=None, residual=None,
                 out_scale=None, layer_norm=None, ln_eps=1e-12,
                 out_dtype=jnp.float32,
                 tm_target=None, tn_target=None, tk_target=None):
    """x: (..., K) @ w: (K, N) + b: (N,) with fused prologue/epilogue."""
    d_tm, d_tn, d_tk = _default_tiles()
    tm_target = tm_target or d_tm
    tn_target = tn_target or d_tn
    tk_target = tk_target or d_tk

    orig_shape = x.shape
    K = orig_shape[-1]
    N = w.shape[1]
    x2 = x.reshape(-1, K)
    M = x2.shape[0]

    # Pad M / K to layout-friendly sizes instead of one huge full-dim block.
    M_pad = _round_up(M, 8)
    K_pad = _round_up(K, 128)
    x2 = _pad2(x2, M_pad, K_pad)
    w2 = _pad2(w, K_pad, N)

    tm = _tile(M_pad, tm_target, 8)
    if tm == M_pad and M_pad >= 16 and M_pad % 16 == 0:
        # prefer >=2 row blocks so both v7x TensorCores get a program.
        tm = _tile(M_pad, M_pad // 2, 8)
    tk = _tile(K_pad, tk_target, 128)
    # LayerNorm epilogue needs the full row resident in one output tile.
    tn = N if layer_norm is not None else _tile(N, tn_target, 128)

    inputs = [x2, w2, b.reshape(1, N)]
    in_specs = [
        pl.BlockSpec((tm, tk), lambda i, j, k: (i, k)),
        pl.BlockSpec((tk, tn), lambda i, j, k: (k, j)),
        pl.BlockSpec((1, tn), lambda i, j, k: (0, j)),
    ]
    if in_affine is not None:
        ia, ib = in_affine
        inputs += [_pad2(ia.reshape(1, K), 1, K_pad),
                   _pad2(ib.reshape(1, K), 1, K_pad)]
        in_specs += [pl.BlockSpec((1, tk), lambda i, j, k: (0, k)),
                     pl.BlockSpec((1, tk), lambda i, j, k: (0, k))]
    if residual is not None:
        inputs.append(_pad2(residual.reshape(-1, N), M_pad, N))
        in_specs.append(pl.BlockSpec((tm, tn), lambda i, j, k: (i, j)))
    if out_scale is not None:
        inputs.append(out_scale.reshape(1, N))
        in_specs.append(pl.BlockSpec((1, tn), lambda i, j, k: (0, j)))
    if layer_norm is not None:
        g, gb = layer_norm
        inputs += [g.reshape(1, N), gb.reshape(1, N)]
        in_specs += [pl.BlockSpec((1, tn), lambda i, j, k: (0, j)),
                     pl.BlockSpec((1, tn), lambda i, j, k: (0, j))]

    kernel = functools.partial(
        _fused_linear_kernel,
        activation=activation,
        has_in_affine=in_affine is not None,
        has_residual=residual is not None,
        has_out_scale=out_scale is not None,
        has_ln=layer_norm is not None,
        ln_eps=ln_eps,
    )

    out = pl.pallas_call(
        kernel,
        out_shape=jax.ShapeDtypeStruct((M_pad, N), out_dtype),
        grid=(M_pad // tm, N // tn, K_pad // tk),
        in_specs=in_specs,
        out_specs=pl.BlockSpec((tm, tn), lambda i, j, k: (i, j)),
        scratch_shapes=[pltpu.VMEM((tm, tn), jnp.float32)],
        compiler_params=pltpu.CompilerParams(
            dimension_semantics=("parallel", "parallel", "arbitrary"),
            vmem_limit_bytes=_vmem_limit_bytes()),
    )(*inputs)
    out = out[:M]
    return out.reshape(orig_shape[:-1] + (N,))


# ----------------------------------------------------------------------------
# Row-tiled LayerNorm (used once, after the embedding sum/concat)
# ----------------------------------------------------------------------------

def _layernorm_kernel(x_ref, g_ref, b_ref, o_ref, *, eps):
    x = x_ref[...].astype(jnp.float32)
    mu = jnp.mean(x, axis=-1, keepdims=True)
    xc = x - mu
    var = jnp.mean(xc * xc, axis=-1, keepdims=True)
    y = xc * jax.lax.rsqrt(var + eps)
    o_ref[...] = (y * g_ref[...] + b_ref[...]).astype(o_ref.dtype)


def layer_norm(x, g, b, eps=1e-12, out_dtype=jnp.float32):
    shape = x.shape
    H = shape[-1]
    x2 = x.reshape(-1, H)
    M = x2.shape[0]
    M_pad = _round_up(M, 8)
    x2 = _pad2(x2, M_pad, H)
    tm = _tile(M_pad, 256, 8)
    out = pl.pallas_call(
        functools.partial(_layernorm_kernel, eps=eps),
        out_shape=jax.ShapeDtypeStruct((M_pad, H), out_dtype),
        grid=(M_pad // tm,),
        in_specs=[
            pl.BlockSpec((tm, H), lambda i: (i, 0)),
            pl.BlockSpec((1, H), lambda i: (0, 0)),
            pl.BlockSpec((1, H), lambda i: (0, 0)),
        ],
        out_specs=pl.BlockSpec((tm, H), lambda i: (i, 0)),
        compiler_params=pltpu.CompilerParams(
            dimension_semantics=("parallel",),
            vmem_limit_bytes=_vmem_limit_bytes()),
    )(x2, g.reshape(1, H), b.reshape(1, H))
    return out[:M].reshape(shape)


# ----------------------------------------------------------------------------
# Multi-head self-attention over the fused (B, T, 3H) bf16 QKV tensor.
# One grid step = one (batch, head); Q/K/V head columns are lane-aligned
# column blocks sliced straight out of the fused QKV tensor — no transposes
# in the wrapper, no unrolled head loop (no vreg spills), small VMEM footprint.
# ----------------------------------------------------------------------------

def _attention_head_kernel(q_ref, k_ref, v_ref, m_ref, o_ref, *, scale):
    q = q_ref[0].astype(jnp.bfloat16)            # (T, hd)
    k = k_ref[0].astype(jnp.bfloat16)
    v = v_ref[0].astype(jnp.bfloat16)
    mask = m_ref[...].astype(jnp.float32)        # (1, T) additive over keys
    # q @ k^T via dot_general contracting the head dim (no explicit k.T).
    s = jax.lax.dot_general(q, k, (((1,), (1,)), ((), ())),
                            preferred_element_type=jnp.float32) * scale
    s = s + mask
    s = s - jnp.max(s, axis=-1, keepdims=True)
    p = jnp.exp(s)
    p = p * pl.reciprocal(jnp.sum(p, axis=-1, keepdims=True), approx=True)
    o = jnp.dot(p.astype(jnp.bfloat16), v, preferred_element_type=jnp.float32)
    o_ref[0] = o.astype(o_ref.dtype)


def attention(qkv, add_mask, n_heads, out_dtype=jnp.bfloat16):
    """qkv: (B, T, 3H) bf16 from the fused QKV projection; add_mask: (B, T)."""
    B, T, H3 = qkv.shape
    H = H3 // 3
    hd = H // n_heads
    # TODO(synk): head_dim must be a multiple of 128 for lane-aligned head
    #             column blocks (true for hidden=2048 configs); smaller head
    #             dims would need a grouped-heads block layout.
    assert hd % 128 == 0, f"head_dim={hd} must be a multiple of 128"
    scale = 1.0 / (hd ** 0.5)
    return pl.pallas_call(
        functools.partial(_attention_head_kernel, scale=scale),
        out_shape=jax.ShapeDtypeStruct((B, T, H), out_dtype),
        grid=(B, n_heads),
        in_specs=[
            pl.BlockSpec((1, T, hd), lambda b, h: (b, 0, h)),                # Q head
            pl.BlockSpec((1, T, hd), lambda b, h: (b, 0, n_heads + h)),      # K head
            pl.BlockSpec((1, T, hd), lambda b, h: (b, 0, 2 * n_heads + h)),  # V head
            pl.BlockSpec((1, T), lambda b, h: (b, 0)),
        ],
        out_specs=pl.BlockSpec((1, T, hd), lambda b, h: (b, 0, h)),
        compiler_params=pltpu.CompilerParams(
            dimension_semantics=("parallel", "parallel"),
            vmem_limit_bytes=_vmem_limit_bytes()),
    )(qkv, qkv, qkv, add_mask)


# ----------------------------------------------------------------------------
# ResMLP cross-token sublayer, H kept lane-dense:
#   out = x + ls * (tok_w @ (aff_a * x + aff_b) + tok_b[:, None])
# ----------------------------------------------------------------------------

def _token_mix_kernel(x_ref, tw_ref, tb_ref, a_ref, b_ref, ls_ref, o_ref):
    x = x_ref[0].astype(jnp.float32)                               # (T, H)
    u = x * a_ref[...].astype(jnp.float32) + b_ref[...].astype(jnp.float32)
    mixed = jnp.dot(tw_ref[...].astype(jnp.bfloat16), u.astype(jnp.bfloat16),
                    preferred_element_type=jnp.float32)            # (T, H)
    mixed = mixed + tb_ref[...].astype(jnp.float32)                # (T, 1) token bias
    o_ref[0] = (x + ls_ref[...].astype(jnp.float32) * mixed).astype(o_ref.dtype)


def token_mix(x, tok_w, tok_b, aff_a, aff_b, ls, out_dtype=jnp.bfloat16):
    B, T, H = x.shape
    return pl.pallas_call(
        _token_mix_kernel,
        out_shape=jax.ShapeDtypeStruct((B, T, H), out_dtype),
        grid=(B,),
        in_specs=[
            pl.BlockSpec((1, T, H), lambda b: (b, 0, 0)),
            pl.BlockSpec((T, T), lambda b: (0, 0)),
            pl.BlockSpec((T, 1), lambda b: (0, 0)),
            pl.BlockSpec((1, H), lambda b: (0, 0)),
            pl.BlockSpec((1, H), lambda b: (0, 0)),
            pl.BlockSpec((1, H), lambda b: (0, 0)),
        ],
        out_specs=pl.BlockSpec((1, T, H), lambda b: (b, 0, 0)),
        compiler_params=pltpu.CompilerParams(
            dimension_semantics=("parallel",),
            vmem_limit_bytes=_vmem_limit_bytes()),
    )(x, tok_w, tok_b.reshape(T, 1),
      aff_a.reshape(1, H), aff_b.reshape(1, H), ls.reshape(1, H))


# ----------------------------------------------------------------------------
# Parameter init (deterministic, synthetic — no checkpoint load)
# Matmul weights stored bf16 (MXU-native, halves HBM traffic); everything
# else (biases, LN/affine/layer-scale, embeddings) kept f32.
# ----------------------------------------------------------------------------

def init_params(key, *, vocab_size, layers, hidden, num_class, token_size,
                visual_dim, max_pos):
    def nrm(k, shape, scale=0.02, dtype=jnp.float32):
        return (scale * jax.random.normal(k, shape)).astype(dtype)

    keys = iter(jax.random.split(key, 8 + 8 * layers))
    p = {
        "word_emb": nrm(next(keys), (vocab_size, hidden)),
        "pos_emb": nrm(next(keys), (max_pos, hidden)),
        "tok_type_emb": nrm(next(keys), (2, hidden)),
        "vis_proj_w": nrm(next(keys), (visual_dim, hidden), dtype=jnp.bfloat16),
        "vis_proj_b": jnp.zeros((hidden,), jnp.float32),
        "emb_ln_g": jnp.ones((hidden,), jnp.float32),
        "emb_ln_b": jnp.zeros((hidden,), jnp.float32),
        "pool_w": nrm(next(keys), (hidden, hidden), dtype=jnp.bfloat16),
        "pool_b": jnp.zeros((hidden,), jnp.float32),
        "cls_w": nrm(next(keys), (hidden, num_class), dtype=jnp.bfloat16),
        "cls_b": jnp.zeros((num_class,), jnp.float32),
        "layers": [],
    }
    for _ in range(layers):
        lp = {
            # fused QKV projection
            "wqkv": nrm(next(keys), (hidden, 3 * hidden), dtype=jnp.bfloat16),
            "bqkv": jnp.zeros((3 * hidden,), jnp.float32),
            "wo": nrm(next(keys), (hidden, hidden), dtype=jnp.bfloat16),
            "bo": jnp.zeros((hidden,), jnp.float32),
            "attn_ln_g": jnp.ones((hidden,), jnp.float32),
            "attn_ln_b": jnp.zeros((hidden,), jnp.float32),
            # ResMLP cross-token sublayer (tok_w stored (out_token, in_token))
            "aff1_a": jnp.ones((hidden,), jnp.float32),
            "aff1_b": jnp.zeros((hidden,), jnp.float32),
            "tok_w": nrm(next(keys), (token_size, token_size), dtype=jnp.bfloat16),
            "tok_b": jnp.zeros((token_size,), jnp.float32),
            "ls1": jnp.full((hidden,), 1e-1, jnp.float32),
            # ResMLP channel MLP sublayer
            "aff2_a": jnp.ones((hidden,), jnp.float32),
            "aff2_b": jnp.zeros((hidden,), jnp.float32),
            "mlp_w1": nrm(next(keys), (hidden, 4 * hidden), dtype=jnp.bfloat16),
            "mlp_b1": jnp.zeros((4 * hidden,), jnp.float32),
            "mlp_w2": nrm(next(keys), (4 * hidden, hidden), dtype=jnp.bfloat16),
            "mlp_b2": jnp.zeros((hidden,), jnp.float32),
            "ls2": jnp.full((hidden,), 1e-1, jnp.float32),
        }
        p["layers"].append(lp)
    return p


# ----------------------------------------------------------------------------
# Forward pass (embedding gathers/concat are XLA glue; all dense math in Pallas)
# Inter-kernel activations flow in bf16; LN/softmax/accumulators/logits in f32.
# ----------------------------------------------------------------------------

def visualbert_resmlp_classify(params, input_ids, token_type_ids, attention_mask,
                               visual_embeds, *, n_heads):
    B, Lt = input_ids.shape
    Lv = visual_embeds.shape[1]

    # --- embeddings ----------------------------------------------------------
    word = jnp.take(params["word_emb"], input_ids, axis=0)            # (B, Lt, H)
    pos = params["pos_emb"][:Lt][None, :, :]
    ttype = jnp.take(params["tok_type_emb"], token_type_ids, axis=0)
    text_emb = word + pos + ttype

    vis_proj = fused_linear(visual_embeds, params["vis_proj_w"], params["vis_proj_b"],
                            out_dtype=jnp.float32)
    vis_emb = (vis_proj
               + params["tok_type_emb"][1][None, None, :]             # visual_token_type_ids = 1
               + params["pos_emb"][0][None, None, :])                 # visual position id = 0

    x = jnp.concatenate([text_emb, vis_emb], axis=1)                  # (B, T, H)
    x = layer_norm(x, params["emb_ln_g"], params["emb_ln_b"], out_dtype=jnp.bfloat16)

    # --- extended additive attention mask ------------------------------------
    vis_mask = jnp.ones((B, Lv), attention_mask.dtype)                # visual_attention_mask = 1
    full_mask = jnp.concatenate([attention_mask, vis_mask], axis=1)   # (B, T)
    add_mask = (1.0 - full_mask.astype(jnp.float32)) * -10000.0

    # --- encoder layers -------------------------------------------------------
    for lp in params["layers"]:
        # self-attention: fused QKV matmul, per-(batch, head) attention kernel,
        # output projection with fused residual + LayerNorm epilogue.
        qkv = fused_linear(x, lp["wqkv"], lp["bqkv"], out_dtype=jnp.bfloat16)   # (B, T, 3H)
        attn = attention(qkv, add_mask, n_heads, out_dtype=jnp.bfloat16)        # (B, T, H)
        x = fused_linear(attn, lp["wo"], lp["bo"],
                         residual=x,
                         layer_norm=(lp["attn_ln_g"], lp["attn_ln_b"]),
                         out_dtype=jnp.bfloat16)

        # ResMLP cross-token sublayer (affine + token mix + layerscale + residual).
        x = token_mix(x, lp["tok_w"], lp["tok_b"],
                      lp["aff1_a"], lp["aff1_b"], lp["ls1"], out_dtype=jnp.bfloat16)

        # ResMLP channel MLP: affine fused as prologue of the first matmul,
        # exact-erf GELU epilogue; layerscale + residual fused into the second.
        h = fused_linear(x, lp["mlp_w1"], lp["mlp_b1"],
                         in_affine=(lp["aff2_a"], lp["aff2_b"]),
                         activation="gelu", out_dtype=jnp.bfloat16)
        x = fused_linear(h, lp["mlp_w2"], lp["mlp_b2"],
                         out_scale=lp["ls2"], residual=x, out_dtype=jnp.bfloat16)

    # --- pooler (token 0, dense + tanh) and classifier ------------------------
    pooled = fused_linear(x[:, 0, :], params["pool_w"], params["pool_b"],
                          activation="tanh", out_dtype=jnp.bfloat16)
    logits = fused_linear(pooled, params["cls_w"], params["cls_b"],
                          out_dtype=jnp.float32)
    return logits


# ----------------------------------------------------------------------------
# Demo
# ----------------------------------------------------------------------------

if __name__ == "__main__":
    # Small-shape stand-ins for the real config (hidden_size=2048, visual_dim=512).
    VOCAB = 64
    LAYERS = 2
    N_HEADS = 2          # head_dim = 128 -> lane-aligned head column blocks
    HIDDEN = 256
    NUM_CLASS = 10
    LT = 8               # text sequence length
    LV = 8               # number of visual tokens
    TOKEN_SIZE = LT + LV
    VIS_DIM = 32
    BATCH = 2

    root = jax.random.PRNGKey(0)
    k_param, k_ids, k_vis = jax.random.split(root, 3)

    params = init_params(
        k_param, vocab_size=VOCAB, layers=LAYERS, hidden=HIDDEN,
        num_class=NUM_CLASS, token_size=TOKEN_SIZE, visual_dim=VIS_DIM, max_pos=LT,
    )

    input_ids = jax.random.randint(k_ids, (BATCH, LT), 0, VOCAB, dtype=jnp.int32)
    token_type_ids = jnp.zeros((BATCH, LT), dtype=jnp.int32)
    attention_mask = jnp.ones((BATCH, LT), dtype=jnp.float32)
    visual_embeds = jax.random.normal(k_vis, (BATCH, LV, VIS_DIM), dtype=jnp.float32)

    logits = visualbert_resmlp_classify(
        params, input_ids, token_type_ids, attention_mask, visual_embeds,
        n_heads=N_HEADS,
    )
    logits = jax.block_until_ready(logits)
    assert logits.shape == (BATCH, NUM_CLASS)
    assert jnp.all(jnp.isfinite(logits))
    print("KERNEL_OK")
</pallas_src>

<mosaic_0001>
module attributes {stable_mosaic.version = 11 : i64} {
  func.func @_fused_linear_kernel(%arg0: i32, %arg1: i32, %arg2: i32, %arg3: memref<8x128xf32, #tpu.memory_space<vmem>>, %arg4: memref<128x256xbf16, #tpu.memory_space<vmem>>, %arg5: memref<1x256xf32, #tpu.memory_space<vmem>>, %arg6: memref<8x256xf32, #tpu.memory_space<vmem>>, %arg7: memref<8x256xf32, #tpu.memory_space<vmem>>) attributes {dimension_semantics = [#tpu.dimension_semantics<parallel>, #tpu.dimension_semantics<parallel>, #tpu.dimension_semantics<arbitrary>], iteration_bounds = array<i64: 2, 1, 1>, scalar_prefetch = 0 : i64, scratch_operands = 1 : i64, tpu.core_type = #tpu.core_type<tc>, window_params = [{transform_indices = @transform_0, window_bounds = array<i64: 8, 128>}, {transform_indices = @transform_1, window_bounds = array<i64: 128, 256>}, {transform_indices = @transform_2, window_bounds = array<i64: 1, 256>}, {transform_indices = @transform_3, window_bounds = array<i64: 8, 256>}]} {
    %c0_i32 = arith.constant 0 : i32
    %0 = arith.cmpi eq, %arg2, %c0_i32 : i32
    %1 = arith.extui %0 : i1 to i32
    %c0_i32_0 = arith.constant 0 : i32
    %2 = arith.cmpi ne, %1, %c0_i32_0 : i32
    scf.if %2 {
      %cst_10 = arith.constant 0.000000e+00 : f32
      %13 = vector.broadcast %cst_10 : f32 to vector<8x256xf32>
      %c0_11 = arith.constant 0 : index
      %c0_12 = arith.constant 0 : index
      %14 = vector.load %arg7[%c0_11, %c0_12] : memref<8x256xf32, #tpu.memory_space<vmem>>, vector<8x256xf32>
      tpu.vector_store %arg7[%c0_11, %c0_12], %13 {strides = array<i32>} : memref<8x256xf32, #tpu.memory_space<vmem>>, vector<8x256xf32>,
    } else {
    }
    %c0 = arith.constant 0 : index
    %c0_1 = arith.constant 0 : index
    %3 = vector.load %arg3[%c0, %c0_1] : memref<8x128xf32, #tpu.memory_space<vmem>>, vector<8x128xf32>
    %4 = arith.truncf %3 : vector<8x128xf32> to vector<8x128xbf16>
    %c0_2 = arith.constant 0 : index
    %c0_3 = arith.constant 0 : index
    %5 = vector.load %arg7[%c0_2, %c0_3] : memref<8x256xf32, #tpu.memory_space<vmem>>, vector<8x256xf32>
    %c0_4 = arith.constant 0 : index
    %c0_5 = arith.constant 0 : index
    %6 = vector.load %arg4[%c0_4, %c0_5] : memref<128x256xbf16, #tpu.memory_space<vmem>>, vector<128x256xbf16>
    %cst = arith.constant dense<0.000000e+00> : vector<8x256xf32>
    %7 = tpu.matmul %4, %6, %cst {dimension_numbers = #tpu.dot_dimension_numbers<[1], [0], [0], [1], [0, 0, 1, 1], [], []>} : vector<8x128xbf16>, vector<128x256xbf16>, vector<8x256xf32> -> vector<8x256xf32>
    %8 = arith.addf %5, %7 : vector<8x256xf32>
    %c0_6 = arith.constant 0 : index
    %c0_7 = arith.constant 0 : index
    %9 = vector.load %arg7[%c0_6, %c0_7] : memref<8x256xf32, #tpu.memory_space<vmem>>, vector<8x256xf32>
    tpu.vector_store %arg7[%c0_6, %c0_7], %8 {strides = array<i32>} : memref<8x256xf32, #tpu.memory_space<vmem>>, vector<8x256xf32>,
    %c0_i32_8 = arith.constant 0 : i32
    %10 = arith.cmpi eq, %arg2, %c0_i32_8 : i32
    %11 = arith.extui %10 : i1 to i32
    %c0_i32_9 = arith.constant 0 : i32
    %12 = arith.cmpi ne, %11, %c0_i32_9 : i32
    scf.if %12 {
      %c0_10 = arith.constant 0 : index
      %c0_11 = arith.constant 0 : index
      %13 = vector.load %arg7[%c0_10, %c0_11] : memref<8x256xf32, #tpu.memory_space<vmem>>, vector<8x256xf32>
      %c0_12 = arith.constant 0 : index
      %c0_13 = arith.constant 0 : index
      %14 = vector.load %arg5[%c0_12, %c0_13] : memref<1x256xf32, #tpu.memory_space<vmem>>, vector<1x256xf32>
      %15 = vector.broadcast %14 : vector<1x256xf32> to vector<8x256xf32>
      %16 = arith.addf %13, %15 : vector<8x256xf32>
      %c0_14 = arith.constant 0 : index
      %c0_15 = arith.constant 0 : index
      %17 = vector.load %arg6[%c0_14, %c0_15] : memref<8x256xf32, #tpu.memory_space<vmem>>, vector<8x256xf32>
      tpu.vector_store %arg6[%c0_14, %c0_15], %16 {strides = array<i32>} : memref<8x256xf32, #tpu.memory_space<vmem>>, vector<8x256xf32>,
    } else {
    }
    return
  }
  func.func @transform_0(%arg0: i32, %arg1: i32, %arg2: i32) -> (i32, i32) {
    %c0_i32 = arith.constant 0 : i32
    return %arg0, %arg2 : i32, i32
  }
  func.func @transform_1(%arg0: i32, %arg1: i32, %arg2: i32) -> (i32, i32) {
    %c0_i32 = arith.constant 0 : i32
    return %arg2, %arg1 : i32, i32
  }
  func.func @transform_2(%arg0: i32, %arg1: i32, %arg2: i32) -> (i32, i32) {
    %c0_i32 = arith.constant 0 : i32
    %c0_i32_0 = arith.constant 0 : i32
    return %c0_i32, %arg1 : i32, i32
  }
  func.func @transform_3(%arg0: i32, %arg1: i32, %arg2: i32) -> (i32, i32) {
    %c0_i32 = arith.constant 0 : i32
    return %arg0, %arg1 : i32, i32
  }
}

</mosaic_0001>

<llo_original>
// kernel: tpu_custom_call.1
$region0: #{tpu_custom_call.1}
  #allocation0 [shape = 'u32[]', space=smem, size = 0x4, offset = 0x4, fixed_abs, tag = 'smem constant byte address 0x4 - core index']
  #allocation1 [shape = 'u32[144,128]{1,0:T(1,128)}', space=vmem, size = 0x12000, scoped, tag = 'internal scratch']
  #allocation2 [shape = 'f32[8,256]{1,0:T(8,128)}', space=vmem, size = 0x2000, scoped, tag = 'scratch operand']
  %s0 = inlined_call_operand.hbm [shape: f32[16,128], index: 0, kind: input, shape index: {}]
  %s1 = inlined_call_operand.hbm [shape: bf16[128,256], index: 1, kind: input, shape index: {}]
  %s2 = inlined_call_operand.vmem [shape: f32[1,256], index: 2, kind: input, shape index: {}]
  %s3 = inlined_call_operand.hbm [shape: f32[16,256], index: 3, kind: output, shape index: {}]
  %s4 = sld [smem:[#allocation0]]
  $region61: #{tpu_custom_call.1} parent=0
    _
  %s6 = ssub.s32 1, %s4
  %s7 = scalar_select 0, %s6, %s4
  $region1: #{tpu_custom_call.1} parent=0
    #allocation3 [shape = 'u8[8192]{0}', space=vmem, size = 0x2000, scoped, tag = 'input window, operand 0']
    #allocation4 [shape = 's32[2]{0}', space=sflag, size = 0x8, scoped, tag = 'scoped memory for tpu_custom_call.1']
    #allocation5 [shape = 's32[2]{0}', space=sflag, size = 0x8, scoped, tag = 'scoped memory for tpu_custom_call.1']
    #allocation6 [shape = 'u8[65536]{0}', space=vmem, size = 0x10000, scoped, tag = 'input window, operand 1, single buffered']
    #allocation7 [shape = 's32[1]{0}', space=sflag, size = 0x4, scoped, tag = 'scoped memory for tpu_custom_call.1']
    #allocation8 [shape = 'u8[16384]{0}', space=vmem, size = 0x4000, scoped, tag = 'output window, operand 0']
    %8 = vsyncpa [#allocation4], 0
    %s9 = scalar_lea.sflag [#allocation4], 1
    %10 = vsyncpa %s9, 0
    %11 = vsyncpa [#allocation7], 0
    %12 = vsyncpa [#allocation5], 0
    %s13 = scalar_lea.sflag [#allocation5], 1
    %14 = vsyncpa %s13, 0
    loop: start=0, step=1, limit=4
    $region2: #{tpu_custom_call.1} parent=1 // loop_pre_header
      _
    $region3: #{tpu_custom_call.1} parent=1 // loop_header
      %s16 = sphi 0, %s20
      %p17 = scmp.ge.s32.totalorder %s16, 4
      %s23 = sphi 0, %s42
      %s24 = sphi 0, %s38
      %s25 = sphi 0, %s34
      %s26 = sphi 0, %s23
      %s27 = sphi 0, %s24
      %s28 = sphi 0, %s25
      %s29 = sphi 0, %s26
      %s30 = sphi 0, %s27
      %s31 = sphi 0, %s28
      %s47 = sphi 0, %s49
      %s50 = sphi 0, %s47
      %s51 = sphi 0, %s50
      %s67 = sphi 0, %s51
      %s75 = sphi 0, %s77
      %s78 = sphi 0, %s75
      %s79 = sphi 0, %s78
      %s95 = sphi 0, %s79
      %s101 = sphi 0, %s103
      %s104 = sphi 0, %s101
      %s105 = sphi 0, %s104
      %s121 = sphi 0, %s105
      %s129 = sphi 0, %s131
      %s132 = sphi 0, %s129
      %s133 = sphi 0, %s132
      %s149 = sphi 0, %s133
    $region4: #{tpu_custom_call.1} parent=1 // loop_header_branch
      %19 = sbr.rel (%p17) target = $region8
    $region5: #{tpu_custom_call.1} parent=1 // loop_body
      %s21 = ssub.s32 %s16, 1
      %s22 = ssub.s32 %s16, 2
      %s32 = sadd.s32 1, %s25
      %p33 = scmp.ge.s32.totalorder %s32, 1
      %s34 = scalar_select %p33, 0, %s32
      %s35 = sadd.s32 1, %s24
      %s36 = scalar_select %p33, %s35, %s24
      %p37 = scmp.ge.s32.totalorder %s36, 1
      %s38 = scalar_select %p37, 0, %s36
      %s39 = sadd.s32 1, %s23
      %s40 = scalar_select %p37, %s39, %s23
      %p41 = scmp.ge.s32.totalorder %s40, 2
      %s42 = scalar_select %p41, 0, %s40
      %s43 = ssub.s32 %s23, %s42
      %s44 = ssub.s32 %s25, %s34
      %s45 = sor.u32 %s43, %s44
      %p46 = scmp.eq.s32.totalorder %s45, 0
      %s48 = sadd.s32 %s47, 1
      %s49 = scalar_select %p46, %s47, %s48
      %p52 = pneg %p46
      %p53 = scmp.eq.s32.totalorder %s16, 1
      %p54 = por %p52, %p53
      %p55 = scmp.ne.s32.totalorder %s47, %s50
      %p56 = scmp.eq.s32.totalorder %s16, 0
      %p57 = por %p55, %p56
      %p58 = scmp.ne.s32.totalorder %s47, %s50
      %p59 = scmp.eq.s32.totalorder %s21, 1
      %p60 = por %p58, %p59
      %p61 = scmp.ne.s32.totalorder %s50, %s51
      %p62 = scmp.eq.s32.totalorder %s21, 0
      %p63 = por %p61, %p62
      %p64 = scmp.ne.s32.totalorder %s50, %s51
      %p65 = scmp.eq.s32.totalorder %s22, 1
      %p66 = por %p64, %p65
      %p68 = scmp.ne.s32.totalorder %s51, %s67
      %p69 = scmp.eq.s32.totalorder %s22, 0
      %p70 = por %p68, %p69
      %s71 = ssub.s32 %s25, %s34
      %s72 = ssub.s32 %s24, %s38
      %s73 = sor.u32 %s71, %s72
      %p74 = scmp.eq.s32.totalorder %s73, 0
      %s76 = sadd.s32 %s75, 1
      %s77 = scalar_select %p74, %s75, %s76
      %p80 = pneg %p74
      %p81 = scmp.eq.s32.totalorder %s16, 1
      %p82 = por %p80, %p81
      %p83 = scmp.ne.s32.totalorder %s75, %s78
      %p84 = scmp.eq.s32.totalorder %s16, 0
      %p85 = por %p83, %p84
      %p86 = scmp.ne.s32.totalorder %s75, %s78
      %p87 = scmp.eq.s32.totalorder %s21, 1
      %p88 = por %p86, %p87
      %p89 = scmp.ne.s32.totalorder %s78, %s79
      %p90 = scmp.eq.s32.totalorder %s21, 0
      %p91 = por %p89, %p90
      %p92 = scmp.ne.s32.totalorder %s78, %s79
      %p93 = scmp.eq.s32.totalorder %s22, 1
      %p94 = por %p92, %p93
      %p96 = scmp.ne.s32.totalorder %s79, %s95
      %p97 = scmp.eq.s32.totalorder %s22, 0
      %p98 = por %p96, %p97
      %s99 = ssub.s32 %s24, %s38
      %p100 = scmp.eq.s32.totalorder %s99, 0
      %s102 = sadd.s32 %s101, 1
      %s103 = scalar_select %p100, %s101, %s102
      %p106 = pneg %p100
      %p107 = scmp.eq.s32.totalorder %s16, 1
      %p108 = por %p106, %p107
      %p109 = scmp.ne.s32.totalorder %s101, %s104
      %p110 = scmp.eq.s32.totalorder %s16, 0
      %p111 = por %p109, %p110
      %p112 = scmp.ne.s32.totalorder %s101, %s104
      %p113 = scmp.eq.s32.totalorder %s21, 1
      %p114 = por %p112, %p113
      %p115 = scmp.ne.s32.totalorder %s104, %s105
      %p116 = scmp.eq.s32.totalorder %s21, 0
      %p117 = por %p115, %p116
      %p118 = scmp.ne.s32.totalorder %s104, %s105
      %p119 = scmp.eq.s32.totalorder %s22, 1
      %p120 = por %p118, %p119
      %p122 = scmp.ne.s32.totalorder %s105, %s121
      %p123 = scmp.eq.s32.totalorder %s22, 0
      %p124 = por %p122, %p123
      %s125 = ssub.s32 %s23, %s42
      %s126 = ssub.s32 %s24, %s38
      %s127 = sor.u32 %s125, %s126
      %p128 = scmp.eq.s32.totalorder %s127, 0
      %s130 = sadd.s32 %s129, 1
      %s131 = scalar_select %p128, %s129, %s130
      %p134 = pneg %p128
      %p135 = scmp.eq.s32.totalorder %s16, 1
      %p136 = por %p134, %p135
      %p137 = scmp.ne.s32.totalorder %s129, %s132
      %p138 = scmp.eq.s32.totalorder %s16, 0
      %p139 = por %p137, %p138
      %p140 = scmp.ne.s32.totalorder %s129, %s132
      %p141 = scmp.eq.s32.totalorder %s21, 1
      %p142 = por %p140, %p141
      %p143 = scmp.ne.s32.totalorder %s132, %s133
      %p144 = scmp.eq.s32.totalorder %s21, 0
      %p145 = por %p143, %p144
      %p146 = scmp.ne.s32.totalorder %s132, %s133
      %p147 = scmp.eq.s32.totalorder %s22, 1
      %p148 = por %p146, %p147
      %p150 = scmp.ne.s32.totalorder %s133, %s149
      %p151 = scmp.eq.s32.totalorder %s22, 0
      %p152 = por %p150, %p151
      %p153 = scmp.le.s32.totalorder 1, %s16
      %p154 = scmp.lt.s32.totalorder %s16, 3
      %p155 = pnand %p153, %p154
      %p156 = pneg %p155
      // Predicated region
      $region9: #{tpu_custom_call.1} parent=5 // pred_check
        _
      $region10: #{tpu_custom_call.1} parent=5 // pred_check_branch
        %158 = sbr.rel (%p155) target = $region12
      $region11: #{tpu_custom_call.1} parent=5 // pred_region
        %s159 = ssub.s32 %s16, 1
        // Predicated region
        $region13: #{tpu_custom_call.1} parent=11 // pred_check
          %p160 = pneg %p91
        $region14: #{tpu_custom_call.1} parent=11 // pred_check_branch
          %162 = sbr.rel (%p160) target = $region16
        $region15: #{tpu_custom_call.1} parent=11 // pred_region
          %s163 = smul.u32 16, %s28
          %s164 = smul.u32 2, %s27
          %s166 = ssub.s32 2048, 2048
          %167 = vsyncadd [#allocation7], %s166
          %s168 = smul.addr %s163, 2
          %s169 = sadd.s32 %s164, %s168
          %s170 = smul.addr %s169, 64
          %s171 = scalar_lea.hbm %s1, %s170
          %s172 = sshll.u32 [#allocation6], 4
          %s173 = int_to_ptr.vmem [resolvable:$true] %s172
          %178 = dma.hbm_to_vmem [thread:$0]  %s171, 2048, %s173, [#allocation7], 128, 128, 8
        $region16: #{tpu_custom_call.1} parent=11 // pred_fallthru
          _
        // Predicated region
        $region17: #{tpu_custom_call.1} parent=11 // pred_check
          %p179 = pneg %p117
        $region18: #{tpu_custom_call.1} parent=11 // pred_check_branch
          %181 = sbr.rel (%p179) target = $region20
        $region19: #{tpu_custom_call.1} parent=11 // pred_region
          %s182 = smul.u32 2, %s27
          %p183 = scmp.lt.s32.totalorder %s182, 1
          %s184 = scalar_select %p183, %s182, 1
          %s185 = scalar_lea.vmem %s2, %s184
          %s186 = smul.u32 2, %s27
        $region20: #{tpu_custom_call.1} parent=11 // pred_fallthru
          _
      $region12: #{tpu_custom_call.1} parent=5 // pred_fallthru
        _
      %p187 = scmp.lt.s32.totalorder %s16, 2
      // Predicated region
      $region21: #{tpu_custom_call.1} parent=5 // pred_check
        %p188 = pneg %p187
      $region22: #{tpu_custom_call.1} parent=5 // pred_check_branch
        %190 = sbr.rel (%p188) target = $region24
      $region23: #{tpu_custom_call.1} parent=5 // pred_region
        // Predicated region
        $region25: #{tpu_custom_call.1} parent=23 // pred_check
          %p191 = pneg %p57
        $region26: #{tpu_custom_call.1} parent=23 // pred_check_branch
          %193 = sbr.rel (%p191) target = $region28
        $region27: #{tpu_custom_call.1} parent=23 // pred_region
          %s194 = sand.u32 %s47, 1
          %s195 = scalar_lea.sflag [#allocation4], %s194
          %s196 = sand.u32 %s47, 1
          %s197 = smul.addr %s196, 8
          %s198 = scalar_lea.vmem [#allocation3], %s197
          %s200 = ssub.s32 128, 128
          %201 = vsyncadd %s195, %s200
          %s202 = sadd.s32 %s25, %s23
          %s203 = smul.addr %s202, 128
          %s204 = scalar_lea.hbm %s0, %s203
          %s206 = sshll.u32 %s198, 4
          %s207 = int_to_ptr.vmem [resolvable:$true] %s206
          %209 = dma.hbm_to_vmem [thread:$0]  %s204, 128, %s207, %s195
        $region28: #{tpu_custom_call.1} parent=23 // pred_fallthru
          _
      $region24: #{tpu_custom_call.1} parent=5 // pred_fallthru
        _
      %p210 = scmp.le.s32.totalorder 1, %s16
      %p211 = scmp.lt.s32.totalorder %s16, 3
      %p212 = pnand %p210, %p211
      %p213 = pneg %p212
      // Predicated region
      $region29: #{tpu_custom_call.1} parent=5 // pred_check
        _
      $region30: #{tpu_custom_call.1} parent=5 // pred_check_branch
        %215 = sbr.rel (%p212) target = $region32
      $region31: #{tpu_custom_call.1} parent=5 // pred_region
        %s216 = ssub.s32 %s16, 1
        %s217 = sand.u32 %s50, 1
        %s218 = scalar_lea.sflag [#allocation4], %s217
        %s219 = sand.u32 %s50, 1
        %s220 = smul.addr %s219, 8
        %s221 = scalar_lea.vmem [#allocation3], %s220
        // Predicated region
        $region33: #{tpu_custom_call.1} parent=31 // pred_check
          %p222 = pneg %p63
        $region34: #{tpu_custom_call.1} parent=31 // pred_check_branch
          %224 = sbr.rel (%p222) target = $region36
        $region35: #{tpu_custom_call.1} parent=31 // pred_region
          %225 = dma.done %s218, 128
        $region36: #{tpu_custom_call.1} parent=31 // pred_fallthru
          _
        // Predicated region
        $region37: #{tpu_custom_call.1} parent=31 // pred_check
          %p226 = pneg %p91
        $region38: #{tpu_custom_call.1} parent=31 // pred_check_branch
          %228 = sbr.rel (%p226) target = $region40
        $region39: #{tpu_custom_call.1} parent=31 // pred_region
          %229 = dma.done [#allocation7], 2048
        $region40: #{tpu_custom_call.1} parent=31 // pred_fallthru
          _
        %s230 = sand.u32 %s50, 1
        %s231 = scalar_lea.sflag [#allocation4], %s230
        %s232 = sand.u32 %s50, 1
        %s233 = smul.addr %s232, 8
        %s234 = scalar_lea.vmem [#allocation3], %s233
        %p235 = pneg %p63
        %p236 = pneg %p60
        %p237 = pneg %p91
        %p238 = pneg %p88
        %s239 = smul.u32 2, %s27
        %p240 = scmp.lt.s32.totalorder %s239, 1
        %s241 = scalar_select %p240, %s239, 1
        %s242 = scalar_lea.vmem %s2, %s241
        %p243 = pneg %p117
        %p244 = pneg %p114
        %p245 = pneg %p145
        %p246 = pneg %p142
        %s247 = sand.u32 %s132, 1
        %s248 = scalar_lea.sflag [#allocation5], %s247
        %s249 = sand.u32 %s132, 1
        %s250 = smul.addr %s249, 16
        %s251 = scalar_lea.vmem [#allocation8], %s250
        %s252 = smul.u32 16, %s28
        %s253 = smul.u32 2, %s27
        %s254 = smul.u32 2, %s27
        %p255 = scmp.lt.s32.totalorder %s254, 1
        %s256 = scalar_select %p255, %s254, 1
        %s257 = scalar_lea.vmem %s2, %s256
        %s258 = smul.u32 2, %s27
        %s259 = smul.u32 2, %s27
        %p261 = scmp.eq.s32.totalorder %s28, 0
        // Predicated region
        $region41: #{tpu_custom_call.1} parent=31 // pred_check
          %p262 = pneg %p261
        $region42: #{tpu_custom_call.1} parent=31 // pred_check_branch
          %264 = sbr.rel (%p262) target = $region44
        $region43: #{tpu_custom_call.1} parent=31 // pred_region
          %265 = vst [vmem:[#allocation2] sm:$0xff] 0.0
          %266 = vst [vmem:[#allocation2 + $0x8] sm:$0xff] 0.0
        $region44: #{tpu_custom_call.1} parent=31 // pred_fallthru
          _
        %v267 = vld [vmem:[%s221] sm:$0xff]
        %v268 = vpack.c.bf16 %v267, %v267
        %v269 = vld [vmem:[#allocation2] sm:$0xff]
        %v270 = vld [vmem:[#allocation2 + $0x8] sm:$0xff]
        %v271 = vld [vmem:[#allocation6] sm:$0xff]
        %v272 = vld [vmem:[#allocation6 + $0x8] sm:$0xff]
        %v273 = vld [vmem:[#allocation6 + $0x10] sm:$0xff]
        %v274 = vld [vmem:[#allocation6 + $0x18] sm:$0xff]
        %v275 = vld [vmem:[#allocation6 + $0x20] sm:$0xff]
        %v276 = vld [vmem:[#allocation6 + $0x28] sm:$0xff]
        %v277 = vld [vmem:[#allocation6 + $0x30] sm:$0xff]
        %v278 = vld [vmem:[#allocation6 + $0x38] sm:$0xff]
        %v279 = vld [vmem:[#allocation6 + $0x40] sm:$0xff]
        %v280 = vld [vmem:[#allocation6 + $0x48] sm:$0xff]
        %v281 = vld [vmem:[#allocation6 + $0x50] sm:$0xff]
        %v282 = vld [vmem:[#allocation6 + $0x58] sm:$0xff]
        %v283 = vld [vmem:[#allocation6 + $0x60] sm:$0xff]
        %v284 = vld [vmem:[#allocation6 + $0x68] sm:$0xff]
        %v285 = vld [vmem:[#allocation6 + $0x70] sm:$0xff]
        %v286 = vld [vmem:[#allocation6 + $0x78] sm:$0xff]
        %v303 = vunpack.c.l.b16 %v271
        %v304 = vunpack.c.h.b16 %v271
        %v305 = vunpack.c.l.b16 %v272
        %v306 = vunpack.c.h.b16 %v272
        %v307 = vunpack.c.l.b16 %v273
        %v308 = vunpack.c.h.b16 %v273
        %v309 = vunpack.c.l.b16 %v274
        %v310 = vunpack.c.h.b16 %v274
        %v311 = vunpack.c.l.b16 %v275
        %v312 = vunpack.c.h.b16 %v275
        %v313 = vunpack.c.l.b16 %v276
        %v314 = vunpack.c.h.b16 %v276
        %v315 = vunpack.c.l.b16 %v277
        %v316 = vunpack.c.h.b16 %v277
        %v317 = vunpack.c.l.b16 %v278
        %v318 = vunpack.c.h.b16 %v278
        %v319 = vunpack.c.l.b16 %v279
        %v320 = vunpack.c.h.b16 %v279
        %v321 = vunpack.c.l.b16 %v280
        %v322 = vunpack.c.h.b16 %v280
        %v323 = vunpack.c.l.b16 %v281
        %v324 = vunpack.c.h.b16 %v281
        %v325 = vunpack.c.l.b16 %v282
        %v326 = vunpack.c.h.b16 %v282
        %v327 = vunpack.c.l.b16 %v283
        %v328 = vunpack.c.h.b16 %v283
        %v329 = vunpack.c.l.b16 %v284
        %v330 = vunpack.c.h.b16 %v284
        %v331 = vunpack.c.l.b16 %v285
        %v332 = vunpack.c.h.b16 %v285
        %v333 = vunpack.c.l.b16 %v286
        %v334 = vunpack.c.h.b16 %v286
        %v335 = vpack.c.b16 %v305, %v303
        %v336 = vpack.c.b16 %v306, %v304
        %v337 = vpack.c.b16 %v309, %v307
        %v338 = vpack.c.b16 %v310, %v308
        %v339 = vpack.c.b16 %v313, %v311
        %v340 = vpack.c.b16 %v314, %v312
        %v341 = vpack.c.b16 %v317, %v315
        %v342 = vpack.c.b16 %v318, %v316
        %v343 = vpack.c.b16 %v321, %v319
        %v344 = vpack.c.b16 %v322, %v320
        %v345 = vpack.c.b16 %v325, %v323
        %v346 = vpack.c.b16 %v326, %v324
        %v347 = vpack.c.b16 %v329, %v327
        %v348 = vpack.c.b16 %v330, %v328
        %v349 = vpack.c.b16 %v333, %v331
        %v350 = vpack.c.b16 %v334, %v332
        %367 = vmatprep.subr.bf16.mxu0 %v350
        %368 = vmatpush1.bf16.msra.mxu0 %v349
        %369 = vmatprep.subr.bf16.mxu0 %v348
        %370 = vmatpush1.bf16.msra.mxu0 %v347
        %371 = vmatprep.subr.bf16.mxu0 %v346
        %372 = vmatpush1.bf16.msra.mxu0 %v345
        %373 = vmatprep.subr.bf16.mxu0 %v344
        %374 = vmatpush1.bf16.msra.mxu0 %v343
        %375 = vmatprep.subr.bf16.mxu0 %v342
        %376 = vmatpush1.bf16.msra.mxu0 %v341
        %377 = vmatprep.subr.bf16.mxu0 %v340
        %378 = vmatpush1.bf16.msra.mxu0 %v339
        %379 = vmatprep.subr.bf16.mxu0 %v338
        %380 = vmatpush1.bf16.msra.mxu0 %v337
        %381 = vmatprep.subr.bf16.mxu0 %v336
        %382 = vmatpush1.bf16.msra.mxu0 %v335
        %383 = vmatprep.subr.bf16.mxu0 0
        %384 = vmatpush2.bf16.msra.mxu0 0
        %385 = vmatprep.subr.bf16.mxu0 0
        %386 = vmatpush2.bf16.msra.mxu0 0
        %387 = vmatprep.subr.bf16.mxu0 0
        %388 = vmatpush2.bf16.msra.mxu0 0
        %389 = vmatprep.subr.bf16.mxu0 0
        %390 = vmatpush2.bf16.msra.mxu0 0
        %391 = vmatprep.subr.bf16.mxu0 0
        %392 = vmatpush2.bf16.msra.mxu0 0
        %393 = vmatprep.subr.bf16.mxu0 0
        %394 = vmatpush2.bf16.msra.mxu0 0
        %395 = vmatprep.subr.bf16.mxu0 0
        %396 = vmatpush2.bf16.msra.mxu0 0
        %397 = vmatprep.subr.bf16.mxu0 0
        %398 = vmatpush2.bf16.msra.mxu0 0
        %399 = vmatprep.mubr.bf16.mxu0 0
        %400 = vmatmul.mubr.bf16.gmra.mxu0 %v268
        %v401 = vpop.f32.mrf.mxu0
        %v402 = vadd.f32 0.0, %v401
        %v403 = vpop.f32.mrf.mxu0
        %v404 = vadd.f32 0.0, %v403
        %v405 = vpop.f32.mrf.mxu0
        %v406 = vpop.f32.mrf.mxu0
        %407 = vdwg.mxu0
        %v408 = vadd.f32 %v269, %v402
        %v409 = vadd.f32 %v270, %v404
        %410 = vst [vmem:[#allocation2] sm:$0xff] %v408
        %411 = vst [vmem:[#allocation2 + $0x8] sm:$0xff] %v409
        // Predicated region
        $region45: #{tpu_custom_call.1} parent=31 // pred_check
          %p412 = pneg %p261
        $region46: #{tpu_custom_call.1} parent=31 // pred_check_branch
          %414 = sbr.rel (%p412) target = $region48
        $region47: #{tpu_custom_call.1} parent=31 // pred_region
          %v415 = vld [vmem:[#allocation2] sm:$0xff]
          %v416 = vld [vmem:[#allocation2 + $0x8] sm:$0xff]
          %v417 = vld [vmem:[%s257] sm:$0x3]
          %v419 = vlaneseq
          %v420 = vshrl.u32 %v419, 7
          %v421 = vsub.s32 0, %v420
          %v422 = vrot.slane %v417, %v421
          %v423 = vlaneseq
          %v424 = vshrl.u32 %v423, 7
          %v425 = vsub.s32 1, %v424
          %v426 = vrot.slane %v417, %v425
          %v429 = vadd.f32 %v415, %v422
          %v430 = vadd.f32 %v416, %v426
          %431 = vst [vmem:[%s251] sm:$0xff] %v429
          %432 = vst [vmem:[%s251 + $0x8] sm:$0xff] %v430
        $region48: #{tpu_custom_call.1} parent=31 // pred_fallthru
          _
        %s433 = sand.u32 %s132, 1
        %s434 = scalar_lea.sflag [#allocation5], %s433
        %s435 = sand.u32 %s132, 1
        %s436 = smul.addr %s435, 16
        %s437 = scalar_lea.vmem [#allocation8], %s436
        // Predicated region
        $region49: #{tpu_custom_call.1} parent=31 // pred_check
          %p438 = pneg %p142
        $region50: #{tpu_custom_call.1} parent=31 // pred_check_branch
          %440 = sbr.rel (%p438) target = $region52
        $region51: #{tpu_custom_call.1} parent=31 // pred_region
          %s441 = smul.u32 2, %s27
          %s443 = ssub.s32 256, 256
          %444 = vsyncadd %s434, %s443
          %s445 = smul.addr %s26, 2
          %s446 = sadd.s32 %s441, %s445
          %s447 = smul.addr %s446, 128
          %s448 = scalar_lea.hbm %s3, %s447
          %s450 = sshll.u32 %s437, 4
          %s451 = int_to_ptr.vmem [resolvable:$true] %s450
          %453 = dma.vmem_to_hbm [thread:$0]  %s451, 256, %s448, %s434
        $region52: #{tpu_custom_call.1} parent=31 // pred_fallthru
          _
      $region32: #{tpu_custom_call.1} parent=5 // pred_fallthru
        _
      %p454 = scmp.le.s32.totalorder 2, %s16
      // Predicated region
      $region53: #{tpu_custom_call.1} parent=5 // pred_check
        %p455 = pneg %p454
      $region54: #{tpu_custom_call.1} parent=5 // pred_check_branch
        %457 = sbr.rel (%p455) target = $region56
      $region55: #{tpu_custom_call.1} parent=5 // pred_region
        %s458 = ssub.s32 %s16, 2
        // Predicated region
        $region57: #{tpu_custom_call.1} parent=55 // pred_check
          %p459 = pneg %p148
        $region58: #{tpu_custom_call.1} parent=55 // pred_check_branch
          %461 = sbr.rel (%p459) target = $region60
        $region59: #{tpu_custom_call.1} parent=55 // pred_region
          %s462 = sand.u32 %s133, 1
          %s463 = scalar_lea.sflag [#allocation5], %s462
          %s464 = sand.u32 %s133, 1
          %s465 = smul.addr %s464, 16
          %s466 = scalar_lea.vmem [#allocation8], %s465
          %467 = dma.done %s463, 256
        $region60: #{tpu_custom_call.1} parent=55 // pred_fallthru
          _
      $region56: #{tpu_custom_call.1} parent=5 // pred_fallthru
        _
    $region6: #{tpu_custom_call.1} parent=1 // loop_footer
      %s20 = sadd.s32 1, %s16
    $region7: #{tpu_custom_call.1} parent=1 // loop_footer_branch
      %15 = sbr.rel target = $region3
    $region8: #{tpu_custom_call.1} parent=1 // loop_exit
      _
    %468 = vsyncpa [#allocation4], 1
    %s469 = scalar_lea.sflag [#allocation4], 1
    %470 = vsyncpa %s469, 1
    %471 = vsyncpa [#allocation7], 1
    %472 = vsyncpa [#allocation5], 1
    %s473 = scalar_lea.sflag [#allocation5], 1
    %474 = vsyncpa %s473, 1

</llo_original>
